<compile_context>
chip_gen: v7x
topology: tpu7x:2x2x1
jax: 0.10.0
libtpu: 0.0.40
codegen_flags: <defaults>
</compile_context>

<pallas_src>
import functools

import jax
import jax.numpy as jnp
from jax.experimental import pallas as pl
from jax.experimental.pallas import tpu as pltpu

# ----------------------- small synthetic hyper-parameters --------------------
N_FFT = 32                        # STFT filter_length
HOP = 32                          # STFT hop_length (== N_FFT -> framing is a reshape)
CUTOFF = N_FFT // 2 + 1           # 17 frequency bins
ENC_CH = [CUTOFF, 16, 16, 16, 32]
ENC_K = [3, 3, 3, 3]
ENC_S = [2, 2, 2, 1]
ENC_P = [1, 1, 1, 1]
HIDDEN = 32                       # LSTMCell hidden size


def _vmem_spec():
    return pl.BlockSpec(memory_space=pltpu.MemorySpace.VMEM)


# --------------------------- in-kernel conv building block ---------------------
def _conv_block(x2d, lin, cin, w_bf16, bias, *, k, stride, pad, batch):
    """One Conv1d + ReLU as a single im2col matmul.

    x2d:    [batch*lin, cin] f32, batch-major rows.
    w_bf16: [k*cin, cout] bf16 (row index = kk*cin + c).
    bias:   [1, cout] f32.
    Returns ([batch*lout, cout] f32, lout).
    """
    lout = (lin + 2 * pad - k) // stride + 1
    zpad = jnp.zeros((pad, cin), jnp.float32)
    rows = []
    for bi in range(batch):                                    # static tiny loops
        xb = x2d[bi * lin:(bi + 1) * lin, :]                   # [lin, cin]
        xbp = jnp.concatenate([zpad, xb, zpad], axis=0)        # [lin+2p, cin]
        for t in range(lout):
            base = t * stride
            # one patch row: K taps laid out along lanes -> [1, k*cin]
            rows.append(jnp.concatenate(
                [xbp[base + kk:base + kk + 1, :] for kk in range(k)], axis=1))
    patches = jnp.concatenate(rows, axis=0)                    # [batch*lout, k*cin]
    y = jnp.dot(patches.astype(jnp.bfloat16), w_bf16,
                preferred_element_type=jnp.float32) + bias     # [batch*lout, cout]
    return jnp.maximum(y, 0.0), lout


# ------------------------------- fused forward kernel --------------------------
def _silero_fused_kernel(frames_ref, basis_ref,
                         w0_ref, b0_ref, w1_ref, b1_ref,
                         w2_ref, b2_ref, w3_ref, b3_ref,
                         wih_ref, bg_ref, cw_ref, cb_ref,
                         prob_ref, h_ref, c_ref, *, batch, n_frames):
    H = HIDDEN

    # ---- STFT magnitude: single matmul against the concatenated [cos|sin] basis
    frames = frames_ref[...]                                   # [B*T, n_fft] f32
    proj = jnp.dot(frames.astype(jnp.bfloat16), basis_ref[...],
                   preferred_element_type=jnp.float32)         # [B*T, 2*CUTOFF]
    real = proj[:, :CUTOFF]
    imag = proj[:, CUTOFF:]
    mag = jnp.sqrt(real * real + imag * imag)                  # [B*T, CUTOFF]

    # drop the first frame of every batch element (SileroSTFT: result[:, :, 1:])
    feats = jnp.concatenate(
        [mag[bi * n_frames + 1:(bi + 1) * n_frames, :] for bi in range(batch)],
        axis=0)                                                # [B*(T-1), CUTOFF]

    # ---- encoder: 4x (Conv1d + ReLU), each a single im2col matmul
    enc_ws = (w0_ref, w1_ref, w2_ref, w3_ref)
    enc_bs = (b0_ref, b1_ref, b2_ref, b3_ref)
    x2d, lin = feats, n_frames - 1
    for li in range(4):
        x2d, lin = _conv_block(x2d, lin, ENC_CH[li],
                               enc_ws[li][...], enc_bs[li][...],
                               k=ENC_K[li], stride=ENC_S[li], pad=ENC_P[li],
                               batch=batch)
    # encoder collapses time to length 1 -> x2d is [B, ENC_CH[-1]] (decoder's squeeze(-1))

    # ---- decoder: LSTMCell (zero initial state) -> [Dropout=id] -> ReLU
    #               -> Conv1d(H,1,1) -> Sigmoid
    # h0 = c0 = 0, so the h0 @ W_hh matmul and the f_gate*c0 term vanish;
    # b_ih + b_hh were pre-folded into bg_ref at init.  Gate order [i, f, g, o].
    gates = jnp.dot(x2d, wih_ref[...],
                    preferred_element_type=jnp.float32) + bg_ref[...]   # [B, 4H]
    i_g = jax.nn.sigmoid(gates[:, 0 * H:1 * H])
    g_g = jnp.tanh(gates[:, 2 * H:3 * H])
    o_g = jax.nn.sigmoid(gates[:, 3 * H:4 * H])
    c = i_g * g_g
    h = o_g * jnp.tanh(c)
    h_ref[...] = h
    c_ref[...] = c
    # TODO(synk): nn.Dropout is the identity in inference mode; no RNG path here.
    a = jnp.maximum(h, 0.0)                                    # ReLU
    logit = jnp.dot(a, cw_ref[...],
                    preferred_element_type=jnp.float32) + cb_ref[...]   # Conv1d(H,1,1)
    prob_ref[...] = jax.nn.sigmoid(logit)                      # [B, 1]


# --------------------------------- parameters ---------------------------------
def init_params(key):
    keys = jax.random.split(key, 16)
    params = {}

    enc = []
    ki = 0
    for li in range(4):
        cin, cout, k = ENC_CH[li], ENC_CH[li + 1], ENC_K[li]
        # stored pre-flattened for im2col: [k*cin, cout] (row index = kk*cin + c),
        # bf16 for MXU-native matmuls (f32 accumulation in-kernel).
        w = 0.1 * jax.random.normal(keys[ki], (k * cin, cout), jnp.float32); ki += 1
        b = 0.1 * jax.random.normal(keys[ki], (1, cout), jnp.float32); ki += 1
        enc.append({"w": w.astype(jnp.bfloat16), "b": b})
    params["encoder"] = enc

    H, cin = HIDDEN, ENC_CH[-1]
    b_ih = 0.1 * jax.random.normal(keys[ki + 1], (1, 4 * H), jnp.float32)
    b_hh = 0.1 * jax.random.normal(keys[ki + 2], (1, 4 * H), jnp.float32)
    params["decoder"] = {
        # pre-transposed: [cin, 4H] so the kernel does x @ W; biases pre-folded.
        "w_ih": 0.1 * jax.random.normal(keys[ki + 0], (cin, 4 * H), jnp.float32),
        "b_gate": b_ih + b_hh,
        "conv_w": 0.1 * jax.random.normal(keys[ki + 3], (H, 1), jnp.float32),
        "conv_b": 0.1 * jax.random.normal(keys[ki + 4], (1, 1), jnp.float32),
    }
    # TODO(synk): LSTMCell W_hh only matters when a nonzero carried state is fed;
    # this forward mirrors the module's default (state == zeros(0)) path.

    # STFT DFT basis (hann-windowed): cos and -sin halves concatenated along lanes.
    n = jnp.arange(N_FFT, dtype=jnp.float32)
    win = 0.5 - 0.5 * jnp.cos(2.0 * jnp.pi * n / N_FFT)
    f = jnp.arange(CUTOFF, dtype=jnp.float32)
    ang = 2.0 * jnp.pi * n[:, None] * f[None, :] / N_FFT
    basis = jnp.concatenate([jnp.cos(ang) * win[:, None],
                             -jnp.sin(ang) * win[:, None]], axis=1)  # [n_fft, 2*cutoff]
    params["stft_basis"] = basis.astype(jnp.bfloat16)
    return params


# ----------------------------------- forward ----------------------------------
def _encoder_out_len(lin):
    for li in range(4):
        lin = (lin + 2 * ENC_P[li] - ENC_K[li]) // ENC_S[li] + 1
    return lin


@jax.jit
def silero_vad_forward(x, params):
    # x: [B, N] float32 raw audio (the len(x.shape) == 2 branch of the module)
    B, N = x.shape
    pad = N_FFT // 2
    xp = jnp.pad(x, ((0, 0), (pad, pad)), mode="reflect")      # glue: reflect pad
    T = (xp.shape[1] - N_FFT) // HOP + 1
    # HOP == N_FFT -> frames are contiguous: plain reshape, no gather HLO.
    assert HOP == N_FFT and xp.shape[1] == T * N_FFT
    assert _encoder_out_len(T - 1) == 1, "encoder must collapse time to length 1"
    frames = xp.reshape(B * T, N_FFT)

    enc = params["encoder"]
    dec = params["decoder"]
    kernel = functools.partial(_silero_fused_kernel, batch=B, n_frames=T)
    prob, h1, c1 = pl.pallas_call(
        kernel,
        out_shape=(jax.ShapeDtypeStruct((B, 1), jnp.float32),
                   jax.ShapeDtypeStruct((B, HIDDEN), jnp.float32),
                   jax.ShapeDtypeStruct((B, HIDDEN), jnp.float32)),
        in_specs=[_vmem_spec()] * 14,
        out_specs=(_vmem_spec(), _vmem_spec(), _vmem_spec()),
    )(frames, params["stft_basis"],
      enc[0]["w"], enc[0]["b"], enc[1]["w"], enc[1]["b"],
      enc[2]["w"], enc[2]["b"], enc[3]["w"], enc[3]["b"],
      dec["w_ih"], dec["b_gate"], dec["conv_w"], dec["conv_b"])

    state = jnp.stack([h1, c1])                                # torch: stack([h, c]) -> [2, B, H]
    # torch: out is [B, 1, 1]; forward returns out.squeeze(1) -> [B, 1]
    return prob, state


if __name__ == "__main__":
    key = jax.random.PRNGKey(0)
    pkey, xkey = jax.random.split(key)
    params = init_params(pkey)
    x = jax.random.normal(xkey, (2, 256), dtype=jnp.float32)   # batch=2 audio chunks
    out, state = silero_vad_forward(x, params)
    jax.block_until_ready(out)
    jax.block_until_ready(state)
    assert out.shape == (2, 1)
    assert state.shape == (2, 2, HIDDEN)
    assert bool(jnp.all(jnp.isfinite(out)))
    print("KERNEL_OK")
</pallas_src>

<mosaic_0001>
module attributes {stable_mosaic.version = 11 : i64} {
  func.func @_silero_fused_kernel(%arg0: memref<18x32xf32, #tpu.memory_space<vmem>>, %arg1: memref<32x34xbf16, #tpu.memory_space<vmem>>, %arg2: memref<51x16xbf16, #tpu.memory_space<vmem>>, %arg3: memref<1x16xf32, #tpu.memory_space<vmem>>, %arg4: memref<48x16xbf16, #tpu.memory_space<vmem>>, %arg5: memref<1x16xf32, #tpu.memory_space<vmem>>, %arg6: memref<48x16xbf16, #tpu.memory_space<vmem>>, %arg7: memref<1x16xf32, #tpu.memory_space<vmem>>, %arg8: memref<48x32xbf16, #tpu.memory_space<vmem>>, %arg9: memref<1x32xf32, #tpu.memory_space<vmem>>, %arg10: memref<32x128xf32, #tpu.memory_space<vmem>>, %arg11: memref<1x128xf32, #tpu.memory_space<vmem>>, %arg12: memref<32x1xf32, #tpu.memory_space<vmem>>, %arg13: memref<1x1xf32, #tpu.memory_space<vmem>>, %arg14: memref<2x1xf32, #tpu.memory_space<vmem>>, %arg15: memref<2x32xf32, #tpu.memory_space<vmem>>, %arg16: memref<2x32xf32, #tpu.memory_space<vmem>>) attributes {dimension_semantics = [], scalar_prefetch = 0 : i64, scratch_operands = 0 : i64, tpu.core_type = #tpu.core_type<tc>} {
    %c0 = arith.constant 0 : index
    %c0_0 = arith.constant 0 : index
    %0 = vector.load %arg0[%c0, %c0_0] : memref<18x32xf32, #tpu.memory_space<vmem>>, vector<18x32xf32>
    %1 = arith.truncf %0 : vector<18x32xf32> to vector<18x32xbf16>
    %c0_1 = arith.constant 0 : index
    %c0_2 = arith.constant 0 : index
    %2 = vector.load %arg1[%c0_1, %c0_2] : memref<32x34xbf16, #tpu.memory_space<vmem>>, vector<32x34xbf16>
    %cst = arith.constant dense<0.000000e+00> : vector<18x34xf32>
    %3 = tpu.matmul %1, %2, %cst {dimension_numbers = #tpu.dot_dimension_numbers<[1], [0], [0], [1], [0, 0, 1, 1], [], []>} : vector<18x32xbf16>, vector<32x34xbf16>, vector<18x34xf32> -> vector<18x34xf32>
    %4 = vector.extract_strided_slice %3 {offsets = [0, 0], sizes = [18, 17], strides = [1, 1]} : vector<18x34xf32> to vector<18x17xf32>
    %5 = vector.extract_strided_slice %3 {offsets = [0, 17], sizes = [18, 17], strides = [1, 1]} : vector<18x34xf32> to vector<18x17xf32>
    %6 = arith.mulf %4, %4 : vector<18x17xf32>
    %7 = arith.mulf %5, %5 : vector<18x17xf32>
    %8 = arith.addf %6, %7 : vector<18x17xf32>
    %9 = math.sqrt %8 : vector<18x17xf32>
    %10 = vector.extract_strided_slice %9 {offsets = [1, 0], sizes = [8, 17], strides = [1, 1]} : vector<18x17xf32> to vector<8x17xf32>
    %11 = vector.extract_strided_slice %9 {offsets = [10, 0], sizes = [8, 17], strides = [1, 1]} : vector<18x17xf32> to vector<8x17xf32>
    %12 = tpu.concatenate %10, %11 in 0 : vector<8x17xf32>, vector<8x17xf32> -> vector<16x17xf32>
    %c0_3 = arith.constant 0 : index
    %c0_4 = arith.constant 0 : index
    %13 = vector.load %arg2[%c0_3, %c0_4] : memref<51x16xbf16, #tpu.memory_space<vmem>>, vector<51x16xbf16>
    %c0_5 = arith.constant 0 : index
    %c0_6 = arith.constant 0 : index
    %14 = vector.load %arg3[%c0_5, %c0_6] : memref<1x16xf32, #tpu.memory_space<vmem>>, vector<1x16xf32>
    %cst_7 = arith.constant 0.000000e+00 : f32
    %15 = vector.broadcast %cst_7 : f32 to vector<1x17xf32>
    %16 = vector.extract_strided_slice %12 {offsets = [0, 0], sizes = [8, 17], strides = [1, 1]} : vector<16x17xf32> to vector<8x17xf32>
    %17 = tpu.concatenate %15, %16, %15 in 0 : vector<1x17xf32>, vector<8x17xf32>, vector<1x17xf32> -> vector<10x17xf32>
    %18 = vector.extract_strided_slice %17 {offsets = [0, 0], sizes = [1, 17], strides = [1, 1]} : vector<10x17xf32> to vector<1x17xf32>
    %19 = vector.extract_strided_slice %17 {offsets = [1, 0], sizes = [1, 17], strides = [1, 1]} : vector<10x17xf32> to vector<1x17xf32>
    %20 = vector.extract_strided_slice %17 {offsets = [2, 0], sizes = [1, 17], strides = [1, 1]} : vector<10x17xf32> to vector<1x17xf32>
    %21 = tpu.concatenate %18, %19, %20 in 1 : vector<1x17xf32>, vector<1x17xf32>, vector<1x17xf32> -> vector<1x51xf32>
    %22 = vector.extract_strided_slice %17 {offsets = [2, 0], sizes = [1, 17], strides = [1, 1]} : vector<10x17xf32> to vector<1x17xf32>
    %23 = vector.extract_strided_slice %17 {offsets = [3, 0], sizes = [1, 17], strides = [1, 1]} : vector<10x17xf32> to vector<1x17xf32>
    %24 = vector.extract_strided_slice %17 {offsets = [4, 0], sizes = [1, 17], strides = [1, 1]} : vector<10x17xf32> to vector<1x17xf32>
    %25 = tpu.concatenate %22, %23, %24 in 1 : vector<1x17xf32>, vector<1x17xf32>, vector<1x17xf32> -> vector<1x51xf32>
    %26 = vector.extract_strided_slice %17 {offsets = [4, 0], sizes = [1, 17], strides = [1, 1]} : vector<10x17xf32> to vector<1x17xf32>
    %27 = vector.extract_strided_slice %17 {offsets = [5, 0], sizes = [1, 17], strides = [1, 1]} : vector<10x17xf32> to vector<1x17xf32>
    %28 = vector.extract_strided_slice %17 {offsets = [6, 0], sizes = [1, 17], strides = [1, 1]} : vector<10x17xf32> to vector<1x17xf32>
    %29 = tpu.concatenate %26, %27, %28 in 1 : vector<1x17xf32>, vector<1x17xf32>, vector<1x17xf32> -> vector<1x51xf32>
    %30 = vector.extract_strided_slice %17 {offsets = [6, 0], sizes = [1, 17], strides = [1, 1]} : vector<10x17xf32> to vector<1x17xf32>
    %31 = vector.extract_strided_slice %17 {offsets = [7, 0], sizes = [1, 17], strides = [1, 1]} : vector<10x17xf32> to vector<1x17xf32>
    %32 = vector.extract_strided_slice %17 {offsets = [8, 0], sizes = [1, 17], strides = [1, 1]} : vector<10x17xf32> to vector<1x17xf32>
    %33 = tpu.concatenate %30, %31, %32 in 1 : vector<1x17xf32>, vector<1x17xf32>, vector<1x17xf32> -> vector<1x51xf32>
    %34 = vector.extract_strided_slice %12 {offsets = [8, 0], sizes = [8, 17], strides = [1, 1]} : vector<16x17xf32> to vector<8x17xf32>
    %35 = tpu.concatenate %15, %34, %15 in 0 : vector<1x17xf32>, vector<8x17xf32>, vector<1x17xf32> -> vector<10x17xf32>
    %36 = vector.extract_strided_slice %35 {offsets = [0, 0], sizes = [1, 17], strides = [1, 1]} : vector<10x17xf32> to vector<1x17xf32>
    %37 = vector.extract_strided_slice %35 {offsets = [1, 0], sizes = [1, 17], strides = [1, 1]} : vector<10x17xf32> to vector<1x17xf32>
    %38 = vector.extract_strided_slice %35 {offsets = [2, 0], sizes = [1, 17], strides = [1, 1]} : vector<10x17xf32> to vector<1x17xf32>
    %39 = tpu.concatenate %36, %37, %38 in 1 : vector<1x17xf32>, vector<1x17xf32>, vector<1x17xf32> -> vector<1x51xf32>
    %40 = vector.extract_strided_slice %35 {offsets = [2, 0], sizes = [1, 17], strides = [1, 1]} : vector<10x17xf32> to vector<1x17xf32>
    %41 = vector.extract_strided_slice %35 {offsets = [3, 0], sizes = [1, 17], strides = [1, 1]} : vector<10x17xf32> to vector<1x17xf32>
    %42 = vector.extract_strided_slice %35 {offsets = [4, 0], sizes = [1, 17], strides = [1, 1]} : vector<10x17xf32> to vector<1x17xf32>
    %43 = tpu.concatenate %40, %41, %42 in 1 : vector<1x17xf32>, vector<1x17xf32>, vector<1x17xf32> -> vector<1x51xf32>
    %44 = vector.extract_strided_slice %35 {offsets = [4, 0], sizes = [1, 17], strides = [1, 1]} : vector<10x17xf32> to vector<1x17xf32>
    %45 = vector.extract_strided_slice %35 {offsets = [5, 0], sizes = [1, 17], strides = [1, 1]} : vector<10x17xf32> to vector<1x17xf32>
    %46 = vector.extract_strided_slice %35 {offsets = [6, 0], sizes = [1, 17], strides = [1, 1]} : vector<10x17xf32> to vector<1x17xf32>
    %47 = tpu.concatenate %44, %45, %46 in 1 : vector<1x17xf32>, vector<1x17xf32>, vector<1x17xf32> -> vector<1x51xf32>
    %48 = vector.extract_strided_slice %35 {offsets = [6, 0], sizes = [1, 17], strides = [1, 1]} : vector<10x17xf32> to vector<1x17xf32>
    %49 = vector.extract_strided_slice %35 {offsets = [7, 0], sizes = [1, 17], strides = [1, 1]} : vector<10x17xf32> to vector<1x17xf32>
    %50 = vector.extract_strided_slice %35 {offsets = [8, 0], sizes = [1, 17], strides = [1, 1]} : vector<10x17xf32> to vector<1x17xf32>
    %51 = tpu.concatenate %48, %49, %50 in 1 : vector<1x17xf32>, vector<1x17xf32>, vector<1x17xf32> -> vector<1x51xf32>
    %52 = tpu.concatenate %21, %25, %29, %33, %39, %43, %47, %51 in 0 : vector<1x51xf32>, vector<1x51xf32>, vector<1x51xf32>, vector<1x51xf32>, vector<1x51xf32>, vector<1x51xf32>, vector<1x51xf32>, vector<1x51xf32> -> vector<8x51xf32>
    %53 = arith.truncf %52 : vector<8x51xf32> to vector<8x51xbf16>
    %cst_8 = arith.constant dense<0.000000e+00> : vector<8x16xf32>
    %54 = tpu.matmul %53, %13, %cst_8 {dimension_numbers = #tpu.dot_dimension_numbers<[1], [0], [0], [1], [0, 0, 1, 1], [], []>} : vector<8x51xbf16>, vector<51x16xbf16>, vector<8x16xf32> -> vector<8x16xf32>
    %55 = vector.broadcast %14 : vector<1x16xf32> to vector<8x16xf32>
    %56 = arith.addf %54, %55 : vector<8x16xf32>
    %cst_9 = arith.constant 0.000000e+00 : f32
    %57 = vector.broadcast %cst_9 : f32 to vector<8x16xf32>
    %58 = arith.maximumf %56, %57 : vector<8x16xf32>
    %c0_10 = arith.constant 0 : index
    %c0_11 = arith.constant 0 : index
    %59 = vector.load %arg4[%c0_10, %c0_11] : memref<48x16xbf16, #tpu.memory_space<vmem>>, vector<48x16xbf16>
    %c0_12 = arith.constant 0 : index
    %c0_13 = arith.constant 0 : index
    %60 = vector.load %arg5[%c0_12, %c0_13] : memref<1x16xf32, #tpu.memory_space<vmem>>, vector<1x16xf32>
    %cst_14 = arith.constant 0.000000e+00 : f32
    %61 = vector.broadcast %cst_14 : f32 to vector<1x16xf32>
    %62 = vector.extract_strided_slice %58 {offsets = [0, 0], sizes = [4, 16], strides = [1, 1]} : vector<8x16xf32> to vector<4x16xf32>
    %63 = tpu.concatenate %61, %62, %61 in 0 : vector<1x16xf32>, vector<4x16xf32>, vector<1x16xf32> -> vector<6x16xf32>
    %64 = vector.extract_strided_slice %63 {offsets = [0, 0], sizes = [1, 16], strides = [1, 1]} : vector<6x16xf32> to vector<1x16xf32>
    %65 = vector.extract_strided_slice %63 {offsets = [1, 0], sizes = [1, 16], strides = [1, 1]} : vector<6x16xf32> to vector<1x16xf32>
    %66 = vector.extract_strided_slice %63 {offsets = [2, 0], sizes = [1, 16], strides = [1, 1]} : vector<6x16xf32> to vector<1x16xf32>
    %67 = tpu.concatenate %64, %65, %66 in 1 : vector<1x16xf32>, vector<1x16xf32>, vector<1x16xf32> -> vector<1x48xf32>
    %68 = vector.extract_strided_slice %63 {offsets = [2, 0], sizes = [1, 16], strides = [1, 1]} : vector<6x16xf32> to vector<1x16xf32>
    %69 = vector.extract_strided_slice %63 {offsets = [3, 0], sizes = [1, 16], strides = [1, 1]} : vector<6x16xf32> to vector<1x16xf32>
    %70 = vector.extract_strided_slice %63 {offsets = [4, 0], sizes = [1, 16], strides = [1, 1]} : vector<6x16xf32> to vector<1x16xf32>
    %71 = tpu.concatenate %68, %69, %70 in 1 : vector<1x16xf32>, vector<1x16xf32>, vector<1x16xf32> -> vector<1x48xf32>
    %72 = vector.extract_strided_slice %58 {offsets = [4, 0], sizes = [4, 16], strides = [1, 1]} : vector<8x16xf32> to vector<4x16xf32>
    %73 = tpu.concatenate %61, %72, %61 in 0 : vector<1x16xf32>, vector<4x16xf32>, vector<1x16xf32> -> vector<6x16xf32>
    %74 = vector.extract_strided_slice %73 {offsets = [0, 0], sizes = [1, 16], strides = [1, 1]} : vector<6x16xf32> to vector<1x16xf32>
    %75 = vector.extract_strided_slice %73 {offsets = [1, 0], sizes = [1, 16], strides = [1, 1]} : vector<6x16xf32> to vector<1x16xf32>
    %76 = vector.extract_strided_slice %73 {offsets = [2, 0], sizes = [1, 16], strides = [1, 1]} : vector<6x16xf32> to vector<1x16xf32>
    %77 = tpu.concatenate %74, %75, %76 in 1 : vector<1x16xf32>, vector<1x16xf32>, vector<1x16xf32> -> vector<1x48xf32>
    %78 = vector.extract_strided_slice %73 {offsets = [2, 0], sizes = [1, 16], strides = [1, 1]} : vector<6x16xf32> to vector<1x16xf32>
    %79 = vector.extract_strided_slice %73 {offsets = [3, 0], sizes = [1, 16], strides = [1, 1]} : vector<6x16xf32> to vector<1x16xf32>
    %80 = vector.extract_strided_slice %73 {offsets = [4, 0], sizes = [1, 16], strides = [1, 1]} : vector<6x16xf32> to vector<1x16xf32>
    %81 = tpu.concatenate %78, %79, %80 in 1 : vector<1x16xf32>, vector<1x16xf32>, vector<1x16xf32> -> vector<1x48xf32>
    %82 = tpu.concatenate %67, %71, %77, %81 in 0 : vector<1x48xf32>, vector<1x48xf32>, vector<1x48xf32>, vector<1x48xf32> -> vector<4x48xf32>
    %83 = arith.truncf %82 : vector<4x48xf32> to vector<4x48xbf16>
    %cst_15 = arith.constant dense<0.000000e+00> : vector<4x16xf32>
    %84 = tpu.matmul %83, %59, %cst_15 {dimension_numbers = #tpu.dot_dimension_numbers<[1], [0], [0], [1], [0, 0, 1, 1], [], []>} : vector<4x48xbf16>, vector<48x16xbf16>, vector<4x16xf32> -> vector<4x16xf32>
    %85 = vector.broadcast %60 : vector<1x16xf32> to vector<4x16xf32>
    %86 = arith.addf %84, %85 : vector<4x16xf32>
    %cst_16 = arith.constant 0.000000e+00 : f32
    %87 = vector.broadcast %cst_16 : f32 to vector<4x16xf32>
    %88 = arith.maximumf %86, %87 : vector<4x16xf32>
    %c0_17 = arith.constant 0 : index
    %c0_18 = arith.constant 0 : index
    %89 = vector.load %arg6[%c0_17, %c0_18] : memref<48x16xbf16, #tpu.memory_space<vmem>>, vector<48x16xbf16>
    %c0_19 = arith.constant 0 : index
    %c0_20 = arith.constant 0 : index
    %90 = vector.load %arg7[%c0_19, %c0_20] : memref<1x16xf32, #tpu.memory_space<vmem>>, vector<1x16xf32>
    %cst_21 = arith.constant 0.000000e+00 : f32
    %91 = vector.broadcast %cst_21 : f32 to vector<1x16xf32>
    %92 = vector.extract_strided_slice %88 {offsets = [0, 0], sizes = [2, 16], strides = [1, 1]} : vector<4x16xf32> to vector<2x16xf32>
    %93 = tpu.concatenate %91, %92, %91 in 0 : vector<1x16xf32>, vector<2x16xf32>, vector<1x16xf32> -> vector<4x16xf32>
    %94 = vector.extract_strided_slice %93 {offsets = [0, 0], sizes = [1, 16], strides = [1, 1]} : vector<4x16xf32> to vector<1x16xf32>
    %95 = vector.extract_strided_slice %93 {offsets = [1, 0], sizes = [1, 16], strides = [1, 1]} : vector<4x16xf32> to vector<1x16xf32>
    %96 = vector.extract_strided_slice %93 {offsets = [2, 0], sizes = [1, 16], strides = [1, 1]} : vector<4x16xf32> to vector<1x16xf32>
    %97 = tpu.concatenate %94, %95, %96 in 1 : vector<1x16xf32>, vector<1x16xf32>, vector<1x16xf32> -> vector<1x48xf32>
    %98 = vector.extract_strided_slice %88 {offsets = [2, 0], sizes = [2, 16], strides = [1, 1]} : vector<4x16xf32> to vector<2x16xf32>
    %99 = tpu.concatenate %91, %98, %91 in 0 : vector<1x16xf32>, vector<2x16xf32>, vector<1x16xf32> -> vector<4x16xf32>
    %100 = vector.extract_strided_slice %99 {offsets = [0, 0], sizes = [1, 16], strides = [1, 1]} : vector<4x16xf32> to vector<1x16xf32>
    %101 = vector.extract_strided_slice %99 {offsets = [1, 0], sizes = [1, 16], strides = [1, 1]} : vector<4x16xf32> to vector<1x16xf32>
    %102 = vector.extract_strided_slice %99 {offsets = [2, 0], sizes = [1, 16], strides = [1, 1]} : vector<4x16xf32> to vector<1x16xf32>
    %103 = tpu.concatenate %100, %101, %102 in 1 : vector<1x16xf32>, vector<1x16xf32>, vector<1x16xf32> -> vector<1x48xf32>
    %104 = tpu.concatenate %97, %103 in 0 : vector<1x48xf32>, vector<1x48xf32> -> vector<2x48xf32>
    %105 = arith.truncf %104 : vector<2x48xf32> to vector<2x48xbf16>
    %cst_22 = arith.constant dense<0.000000e+00> : vector<2x16xf32>
    %106 = tpu.matmul %105, %89, %cst_22 {dimension_numbers = #tpu.dot_dimension_numbers<[1], [0], [0], [1], [0, 0, 1, 1], [], []>} : vector<2x48xbf16>, vector<48x16xbf16>, vector<2x16xf32> -> vector<2x16xf32>
    %107 = vector.broadcast %90 : vector<1x16xf32> to vector<2x16xf32>
    %108 = arith.addf %106, %107 : vector<2x16xf32>
    %cst_23 = arith.constant 0.000000e+00 : f32
    %109 = vector.broadcast %cst_23 : f32 to vector<2x16xf32>
    %110 = arith.maximumf %108, %109 : vector<2x16xf32>
    %c0_24 = arith.constant 0 : index
    %c0_25 = arith.constant 0 : index
    %111 = vector.load %arg8[%c0_24, %c0_25] : memref<48x32xbf16, #tpu.memory_space<vmem>>, vector<48x32xbf16>
    %c0_26 = arith.constant 0 : index
    %c0_27 = arith.constant 0 : index
    %112 = vector.load %arg9[%c0_26, %c0_27] : memref<1x32xf32, #tpu.memory_space<vmem>>, vector<1x32xf32>
    %cst_28 = arith.constant 0.000000e+00 : f32
    %113 = vector.broadcast %cst_28 : f32 to vector<1x16xf32>
    %114 = vector.extract_strided_slice %110 {offsets = [0, 0], sizes = [1, 16], strides = [1, 1]} : vector<2x16xf32> to vector<1x16xf32>
    %115 = tpu.concatenate %113, %114, %113 in 0 : vector<1x16xf32>, vector<1x16xf32>, vector<1x16xf32> -> vector<3x16xf32>
    %116 = vector.extract_strided_slice %115 {offsets = [0, 0], sizes = [1, 16], strides = [1, 1]} : vector<3x16xf32> to vector<1x16xf32>
    %117 = vector.extract_strided_slice %115 {offsets = [1, 0], sizes = [1, 16], strides = [1, 1]} : vector<3x16xf32> to vector<1x16xf32>
    %118 = vector.extract_strided_slice %115 {offsets = [2, 0], sizes = [1, 16], strides = [1, 1]} : vector<3x16xf32> to vector<1x16xf32>
    %119 = tpu.concatenate %116, %117, %118 in 1 : vector<1x16xf32>, vector<1x16xf32>, vector<1x16xf32> -> vector<1x48xf32>
    %120 = vector.extract_strided_slice %110 {offsets = [1, 0], sizes = [1, 16], strides = [1, 1]} : vector<2x16xf32> to vector<1x16xf32>
    %121 = tpu.concatenate %113, %120, %113 in 0 : vector<1x16xf32>, vector<1x16xf32>, vector<1x16xf32> -> vector<3x16xf32>
    %122 = vector.extract_strided_slice %121 {offsets = [0, 0], sizes = [1, 16], strides = [1, 1]} : vector<3x16xf32> to vector<1x16xf32>
    %123 = vector.extract_strided_slice %121 {offsets = [1, 0], sizes = [1, 16], strides = [1, 1]} : vector<3x16xf32> to vector<1x16xf32>
    %124 = vector.extract_strided_slice %121 {offsets = [2, 0], sizes = [1, 16], strides = [1, 1]} : vector<3x16xf32> to vector<1x16xf32>
    %125 = tpu.concatenate %122, %123, %124 in 1 : vector<1x16xf32>, vector<1x16xf32>, vector<1x16xf32> -> vector<1x48xf32>
    %126 = tpu.concatenate %119, %125 in 0 : vector<1x48xf32>, vector<1x48xf32> -> vector<2x48xf32>
    %127 = arith.truncf %126 : vector<2x48xf32> to vector<2x48xbf16>
    %cst_29 = arith.constant dense<0.000000e+00> : vector<2x32xf32>
    %128 = tpu.matmul %127, %111, %cst_29 {dimension_numbers = #tpu.dot_dimension_numbers<[1], [0], [0], [1], [0, 0, 1, 1], [], []>} : vector<2x48xbf16>, vector<48x32xbf16>, vector<2x32xf32> -> vector<2x32xf32>
    %129 = vector.broadcast %112 : vector<1x32xf32> to vector<2x32xf32>
    %130 = arith.addf %128, %129 : vector<2x32xf32>
    %cst_30 = arith.constant 0.000000e+00 : f32
    %131 = vector.broadcast %cst_30 : f32 to vector<2x32xf32>
    %132 = arith.maximumf %130, %131 : vector<2x32xf32>
    %c0_31 = arith.constant 0 : index
    %c0_32 = arith.constant 0 : index
    %133 = vector.load %arg10[%c0_31, %c0_32] : memref<32x128xf32, #tpu.memory_space<vmem>>, vector<32x128xf32>
    %cst_33 = arith.constant dense<0.000000e+00> : vector<2x128xf32>
    %134 = tpu.matmul %132, %133, %cst_33 {dimension_numbers = #tpu.dot_dimension_numbers<[1], [0], [0], [1], [0, 0, 1, 1], [], []>} : vector<2x32xf32>, vector<32x128xf32>, vector<2x128xf32> -> vector<2x128xf32>
    %c0_34 = arith.constant 0 : index
    %c0_35 = arith.constant 0 : index
    %135 = vector.load %arg11[%c0_34, %c0_35] : memref<1x128xf32, #tpu.memory_space<vmem>>, vector<1x128xf32>
    %136 = vector.broadcast %135 : vector<1x128xf32> to vector<2x128xf32>
    %137 = arith.addf %134, %136 : vector<2x128xf32>
    %138 = vector.extract_strided_slice %137 {offsets = [0, 0], sizes = [2, 32], strides = [1, 1]} : vector<2x128xf32> to vector<2x32xf32>
    %139 = arith.negf %138 : vector<2x32xf32>
    %140 = math.exp %139 : vector<2x32xf32>
    %cst_36 = arith.constant 1.000000e+00 : f32
    %141 = vector.broadcast %cst_36 : f32 to vector<2x32xf32>
    %142 = arith.addf %141, %140 : vector<2x32xf32>
    %143 = arith.divf %141, %142 : vector<2x32xf32>
    %144 = vector.extract_strided_slice %137 {offsets = [0, 64], sizes = [2, 32], strides = [1, 1]} : vector<2x128xf32> to vector<2x32xf32>
    %145 = math.tanh %144 : vector<2x32xf32>
    %146 = vector.extract_strided_slice %137 {offsets = [0, 96], sizes = [2, 32], strides = [1, 1]} : vector<2x128xf32> to vector<2x32xf32>
    %147 = arith.negf %146 : vector<2x32xf32>
    %148 = math.exp %147 : vector<2x32xf32>
    %cst_37 = arith.constant 1.000000e+00 : f32
    %149 = vector.broadcast %cst_37 : f32 to vector<2x32xf32>
    %150 = arith.addf %149, %148 : vector<2x32xf32>
    %151 = arith.divf %149, %150 : vector<2x32xf32>
    %152 = arith.mulf %143, %145 : vector<2x32xf32>
    %153 = math.tanh %152 : vector<2x32xf32>
    %154 = arith.mulf %151, %153 : vector<2x32xf32>
    %c0_38 = arith.constant 0 : index
    %c0_39 = arith.constant 0 : index
    %155 = vector.load %arg15[%c0_38, %c0_39] : memref<2x32xf32, #tpu.memory_space<vmem>>, vector<2x32xf32>
    tpu.vector_store %arg15[%c0_38, %c0_39], %154 {strides = array<i32>} : memref<2x32xf32, #tpu.memory_space<vmem>>, vector<2x32xf32>,
    %c0_40 = arith.constant 0 : index
    %c0_41 = arith.constant 0 : index
    %156 = vector.load %arg16[%c0_40, %c0_41] : memref<2x32xf32, #tpu.memory_space<vmem>>, vector<2x32xf32>
    tpu.vector_store %arg16[%c0_40, %c0_41], %152 {strides = array<i32>} : memref<2x32xf32, #tpu.memory_space<vmem>>, vector<2x32xf32>,
    %cst_42 = arith.constant 0.000000e+00 : f32
    %157 = vector.broadcast %cst_42 : f32 to vector<2x32xf32>
    %158 = arith.maximumf %154, %157 : vector<2x32xf32>
    %c0_43 = arith.constant 0 : index
    %c0_44 = arith.constant 0 : index
    %159 = vector.load %arg12[%c0_43, %c0_44] : memref<32x1xf32, #tpu.memory_space<vmem>>, vector<32x1xf32>
    %cst_45 = arith.constant dense<0.000000e+00> : vector<2x1xf32>
    %160 = tpu.matmul %158, %159, %cst_45 {dimension_numbers = #tpu.dot_dimension_numbers<[1], [0], [0], [1], [0, 0, 1, 1], [], []>} : vector<2x32xf32>, vector<32x1xf32>, vector<2x1xf32> -> vector<2x1xf32>
    %c0_46 = arith.constant 0 : index
    %c0_47 = arith.constant 0 : index
    %161 = vector.load %arg13[%c0_46, %c0_47] : memref<1x1xf32, #tpu.memory_space<vmem>>, vector<1x1xf32>
    %162 = vector.broadcast %161 : vector<1x1xf32> to vector<2x1xf32>
    %163 = arith.addf %160, %162 : vector<2x1xf32>
    %164 = arith.negf %163 : vector<2x1xf32>
    %165 = math.exp %164 : vector<2x1xf32>
    %cst_48 = arith.constant 1.000000e+00 : f32
    %166 = vector.broadcast %cst_48 : f32 to vector<2x1xf32>
    %167 = arith.addf %166, %165 : vector<2x1xf32>
    %168 = arith.divf %166, %167 : vector<2x1xf32>
    %c0_49 = arith.constant 0 : index
    %c0_50 = arith.constant 0 : index
    %169 = vector.load %arg14[%c0_49, %c0_50] : memref<2x1xf32, #tpu.memory_space<vmem>>, vector<2x1xf32>
    tpu.vector_store %arg14[%c0_49, %c0_50], %168 {strides = array<i32>} : memref<2x1xf32, #tpu.memory_space<vmem>>, vector<2x1xf32>,
    return
  }
}

</mosaic_0001>

<llo_original>
// kernel: silero_vad_forward.1
$region0: #{silero_vad_forward.1}
  #allocation0 [shape = 'u32[]', space=smem, size = 0x4, offset = 0x4, fixed_abs, tag = 'smem constant byte address 0x4 - core index']
  #allocation1 [shape = 'u32[144,128]{1,0:T(1,128)}', space=vmem, size = 0x12000, scoped, tag = 'internal scratch']
  #allocation2 [shape = 'f32[1,1]{1,0:T(1,128)S(1)}', space=vmem, size = 0x200, scoped, tag = 'scoped memory for silero_vad_forward.1']
  %s0 = inlined_call_operand.vmem [shape: f32[18,32], index: 0, kind: input, shape index: {}]
  %s1 = inlined_call_operand.vmem [shape: bf16[32,34], index: 1, kind: input, shape index: {}]
  %s2 = inlined_call_operand.vmem [shape: bf16[51,16], index: 2, kind: input, shape index: {}]
  %s3 = inlined_call_operand.vmem [shape: f32[1,16], index: 3, kind: input, shape index: {}]
  %s4 = inlined_call_operand.vmem [shape: bf16[48,16], index: 4, kind: input, shape index: {}]
  %s5 = inlined_call_operand.vmem [shape: f32[1,16], index: 5, kind: input, shape index: {}]
  %s6 = inlined_call_operand.vmem [shape: bf16[48,16], index: 6, kind: input, shape index: {}]
  %s7 = inlined_call_operand.vmem [shape: f32[1,16], index: 7, kind: input, shape index: {}]
  %s8 = inlined_call_operand.vmem [shape: bf16[48,32], index: 8, kind: input, shape index: {}]
  %s9 = inlined_call_operand.vmem [shape: f32[1,32], index: 9, kind: input, shape index: {}]
  %s10 = inlined_call_operand.vmem [shape: f32[32,128], index: 10, kind: input, shape index: {}]
  %s11 = inlined_call_operand.vmem [shape: f32[1,128], index: 11, kind: input, shape index: {}]
  %s12 = inlined_call_operand.vmem [shape: f32[32,1], index: 12, kind: input, shape index: {}]
  %s13 = inlined_call_operand.<no memory space> [shape: f32[1,1], index: 13, kind: input, shape index: {}]
  %s14 = inlined_call_operand.vmem [shape: f32[2,1], index: 14, kind: output, shape index: {0}]
  %s15 = inlined_call_operand.vmem [shape: f32[2,32], index: 15, kind: output, shape index: {1}]
  %s16 = inlined_call_operand.vmem [shape: f32[2,32], index: 16, kind: output, shape index: {2}]
  %17 = xla_tuple %s14, %s15, %s16
  %s18 = sld [smem:[#allocation0]]
  $region82: #{silero_vad_forward.1} parent=0
    _
  %s20 = ssub.s32 1, %s18
  %s21 = scalar_select 0, %s20, %s18
  %v22 = vstv %s13
  %23 = vst [vmem:[#allocation2] sm:$0x1] %v22
  // Predicated region
  $region2: #{silero_vad_forward.1} parent=0 // pred_check
    _
  $region3: #{silero_vad_forward.1} parent=0 // pred_check_branch
    %25 = sbr.rel (0) target = $region5
  $region4: #{silero_vad_forward.1} parent=0 // pred_region
    _
  $region5: #{silero_vad_forward.1} parent=0 // pred_fallthru
    _
  // Predicated region
  $region6: #{silero_vad_forward.1} parent=0 // pred_check
    _
  $region7: #{silero_vad_forward.1} parent=0 // pred_check_branch
    %27 = sbr.rel (0) target = $region9
  $region8: #{silero_vad_forward.1} parent=0 // pred_region
    _
  $region9: #{silero_vad_forward.1} parent=0 // pred_fallthru
    _
  // Predicated region
  $region10: #{silero_vad_forward.1} parent=0 // pred_check
    _
  $region11: #{silero_vad_forward.1} parent=0 // pred_check_branch
    %29 = sbr.rel (0) target = $region13
  $region12: #{silero_vad_forward.1} parent=0 // pred_region
    _
  $region13: #{silero_vad_forward.1} parent=0 // pred_fallthru
    _
  // Predicated region
  $region14: #{silero_vad_forward.1} parent=0 // pred_check
    _
  $region15: #{silero_vad_forward.1} parent=0 // pred_check_branch
    %31 = sbr.rel (0) target = $region17
  $region16: #{silero_vad_forward.1} parent=0 // pred_region
    _
  $region17: #{silero_vad_forward.1} parent=0 // pred_fallthru
    _
  // Predicated region
  $region18: #{silero_vad_forward.1} parent=0 // pred_check
    _
  $region19: #{silero_vad_forward.1} parent=0 // pred_check_branch
    %33 = sbr.rel (0) target = $region21
  $region20: #{silero_vad_forward.1} parent=0 // pred_region
    _
  $region21: #{silero_vad_forward.1} parent=0 // pred_fallthru
    _
  // Predicated region
  $region22: #{silero_vad_forward.1} parent=0 // pred_check
    _
  $region23: #{silero_vad_forward.1} parent=0 // pred_check_branch
    %35 = sbr.rel (0) target = $region25
  $region24: #{silero_vad_forward.1} parent=0 // pred_region
    _
  $region25: #{silero_vad_forward.1} parent=0 // pred_fallthru
    _
  // Predicated region
  $region26: #{silero_vad_forward.1} parent=0 // pred_check
    _
  $region27: #{silero_vad_forward.1} parent=0 // pred_check_branch
    %37 = sbr.rel (0) target = $region29
  $region28: #{silero_vad_forward.1} parent=0 // pred_region
    _
  $region29: #{silero_vad_forward.1} parent=0 // pred_fallthru
    _
  // Predicated region
  $region30: #{silero_vad_forward.1} parent=0 // pred_check
    _
  $region31: #{silero_vad_forward.1} parent=0 // pred_check_branch
    %39 = sbr.rel (0) target = $region33
  $region32: #{silero_vad_forward.1} parent=0 // pred_region
    _
  $region33: #{silero_vad_forward.1} parent=0 // pred_fallthru
    _
  // Predicated region
  $region34: #{silero_vad_forward.1} parent=0 // pred_check
    _
  $region35: #{silero_vad_forward.1} parent=0 // pred_check_branch
    %41 = sbr.rel (0) target = $region37
  $region36: #{silero_vad_forward.1} parent=0 // pred_region
    _
  $region37: #{silero_vad_forward.1} parent=0 // pred_fallthru
    _
  // Predicated region
  $region38: #{silero_vad_forward.1} parent=0 // pred_check
    _
  $region39: #{silero_vad_forward.1} parent=0 // pred_check_branch
    %43 = sbr.rel (0) target = $region41
  $region40: #{silero_vad_forward.1} parent=0 // pred_region
    _
  $region41: #{silero_vad_forward.1} parent=0 // pred_fallthru
    _
  // Predicated region
  $region42: #{silero_vad_forward.1} parent=0 // pred_check
    _
  $region43: #{silero_vad_forward.1} parent=0 // pred_check_branch
    %45 = sbr.rel (0) target = $region45
  $region44: #{silero_vad_forward.1} parent=0 // pred_region
    _
  $region45: #{silero_vad_forward.1} parent=0 // pred_fallthru
    _
  // Predicated region
  $region46: #{silero_vad_forward.1} parent=0 // pred_check
    _
  $region47: #{silero_vad_forward.1} parent=0 // pred_check_branch
    %47 = sbr.rel (0) target = $region49
  $region48: #{silero_vad_forward.1} parent=0 // pred_region
    _
  $region49: #{silero_vad_forward.1} parent=0 // pred_fallthru
    _
  // Predicated region
  $region50: #{silero_vad_forward.1} parent=0 // pred_check
    _
  $region51: #{silero_vad_forward.1} parent=0 // pred_check_branch
    %49 = sbr.rel (0) target = $region53
  $region52: #{silero_vad_forward.1} parent=0 // pred_region
    _
  $region53: #{silero_vad_forward.1} parent=0 // pred_fallthru
    _
  // Predicated region
  $region54: #{silero_vad_forward.1} parent=0 // pred_check
    _
  $region55: #{silero_vad_forward.1} parent=0 // pred_check_branch
    %51 = sbr.rel (0) target = $region57
  $region56: #{silero_vad_forward.1} parent=0 // pred_region
    _
  $region57: #{silero_vad_forward.1} parent=0 // pred_fallthru
    _
  %v53 = vld [vmem:[%s0] sm:$0xff]
  %v54 = vld [vmem:[%s0 + $0x8] sm:$0xff]
  %v55 = vld [vmem:[%s0 + $0x10] sm:$0x3]
  %v56 = vpack.c.bf16 %v54, %v53
  %v57 = vpack.c.bf16 %v55, %v55
  %v58 = vld [vmem:[%s1] sm:$0xf]
  %v59 = vld [vmem:[%s1 + $0x4] sm:$0xf]
  %v60 = vld [vmem:[%s1 + $0x8] sm:$0xf]
  %v61 = vld [vmem:[%s1 + $0xc] sm:$0xf]
  %v66 = vunpack.c.l.b16 %v58
  %v67 = vunpack.c.l.b16 %v59
  %v68 = vunpack.c.l.b16 %v60
  %v69 = vunpack.c.l.b16 %v61
  %v70 = vpack.c.b16 %v67, %v66
  %v71 = vpack.c.b16 %v69, %v68
  %vm74 = vcmask 261120
  %v76 = vsel %vm74, %v56, 0
  %v79 = vsel %vm74, %v57, 0
  %81 = vmatprep.subr.bf16.mxu0 0
  %82 = vmatpush1.bf16.msra.mxu0 %v70
  %83 = vmatprep.subr.bf16.mxu0 0
  %84 = vmatpush1.bf16.msra.mxu0 %v71
  %85 = vmatprep.subr.bf16.mxu0 0
  %86 = vmatpush1.bf16.msra.mxu0 0
  %87 = vmatprep.subr.bf16.mxu0 0
  %88 = vmatpush1.bf16.msra.mxu0 0
  %89 = vmatprep.subr.bf16.mxu0 0
  %90 = vmatpush1.bf16.msra.mxu0 0
  %91 = vmatprep.subr.bf16.mxu0 0
  %92 = vmatpush1.bf16.msra.mxu0 0
  %93 = vmatprep.subr.bf16.mxu0 0
  %94 = vmatpush1.bf16.msra.mxu0 0
  %95 = vmatprep.subr.bf16.mxu0 0
  %96 = vmatpush1.bf16.msra.mxu0 0
  %97 = vmatprep.subr.bf16.mxu0 0
  %98 = vmatpush1.bf16.msra.mxu0 0
  %99 = vmatprep.subr.bf16.mxu0 0
  %100 = vmatpush1.bf16.msra.mxu0 0
  %101 = vmatprep.subr.bf16.mxu0 0
  %102 = vmatpush1.bf16.msra.mxu0 0
  %103 = vmatprep.subr.bf16.mxu0 0
  %104 = vmatpush1.bf16.msra.mxu0 0
  %105 = vmatprep.subr.bf16.mxu0 0
  %106 = vmatpush1.bf16.msra.mxu0 0
  %107 = vmatprep.subr.bf16.mxu0 0
  %108 = vmatpush1.bf16.msra.mxu0 0
  %109 = vmatprep.subr.bf16.mxu0 0
  %110 = vmatpush1.bf16.msra.mxu0 0
  %111 = vmatprep.subr.bf16.mxu0 0
  %112 = vmatpush1.bf16.msra.mxu0 0
  %113 = vmatprep.mubr.bf16.mxu0 0
  %114 = vmatmul.mubr.bf16.gmra.mrb[0].mxu0 %v76
  %v115 = vpop.f32.mrb[0].mxu0
  %v116 = vadd.f32 0.0, %v115
  %v117 = vpop.f32.mrb[0].mxu0
  %v118 = vpop.f32.mrb[0].mxu0
  %v119 = vadd.f32 0.0, %v118
  %v120 = vpop.f32.mrb[0].mxu0
  %121 = vmatprep.mubr.bf16.mxu0 0
  %122 = vmatmul.mubr.bf16.gmra.mrb[0].mxu0 %v79
  %v123 = vpop.f32.mrb[0].mxu0
  %v124 = vadd.f32 0.0, %v123
  %v125 = vpop.f32.mrb[0].mxu0
  %v126 = vpop.f32.mrb[0].mxu0
  %v127 = vpop.f32.mrb[0].mxu0
  %128 = vdwg.mxu0
  %v129 = vmul.f32 %v116, %v116
  %v130 = vmul.f32 %v119, %v119
  %v131 = vmul.f32 %v124, %v124
  %135 = vrot.lane.b32.xlu0 %v129, 111
  %v136 = vpop.permute.xlu0 %135
  %137 = vrot.lane.b32.xlu0 %v130, 111
  %v138 = vpop.permute.xlu0 %137
  %139 = vrot.lane.b32.xlu0 %v131, 111
  %v140 = vpop.permute.xlu0 %139
  %v144 = vadd.f32 %v129, %v136
  %v145 = vadd.f32 %v130, %v138
  %v146 = vadd.f32 %v131, %v140
  %v147 = vrsqrt.pop %v144
  %v148 = vmul.f32 %v144, %v147
  %vm149 = vcmp.eq.f32.partialorder %v144, inf
  %v150 = vsel %vm149, %v144, %v148
  %vm151 = vcmp.eq.f32.partialorder %v144, 0.0
  %v152 = vand.u32 %v144, 2147483648
  %v153 = vsel %vm151, %v152, %v150
  %v154 = vrsqrt.pop %v145
  %v155 = vmul.f32 %v145, %v154
  %vm156 = vcmp.eq.f32.partialorder %v145, inf
  %v157 = vsel %vm156, %v145, %v155
  %vm158 = vcmp.eq.f32.partialorder %v145, 0.0
  %v159 = vand.u32 %v145, 2147483648
  %v160 = vsel %vm158, %v159, %v157
  %v161 = vrsqrt.pop %v146
  %v162 = vmul.f32 %v146, %v161
  %vm163 = vcmp.eq.f32.partialorder %v146, inf
  %v164 = vsel %vm163, %v146, %v162
  %vm165 = vcmp.eq.f32.partialorder %v146, 0.0
  %v166 = vand.u32 %v146, 2147483648
  %v167 = vsel %vm165, %v166, %v164
  %vm170 = vcmask 1046528
  %v171 = vrot.slane %v153, 1
  %v172 = vrot.slane %v160, 1
  %v173 = vsel %vm170, %v171, %v172
  %vm175 = vcmask 1045504
  %v176 = vrot.slane %v160, 2
  %v177 = vrot.slane %v167, 2
  %v178 = vsel %vm175, %v176, %v177
  %v179 = vld [vmem:[%s2] sm:$0xf]
  %v180 = vld [vmem:[%s2 + $0x4] sm:$0xf]
  %v181 = vld [vmem:[%s2 + $0x8] sm:$0xf]
  %v182 = vld [vmem:[%s2 + $0xc] sm:$0xf]
  %v183 = vld [vmem:[%s2 + $0x10] sm:$0xf]
  %v184 = vld [vmem:[%s2 + $0x14] sm:$0xf]
  %v185 = vld [vmem:[%s2 + $0x18] sm:$0x3]
  %v186 = vld [vmem:[%s3] sm:$0x1]
  %v187 = vrot.slane %v173, 7
  %vm189 = vcmask 1040384
  %v190 = vsel %vm189, 0.0, %v187
  %v191 = vsel %vm189, %v187, 0.0
  %v193 = vrot.slane %v190, 1
  %194 = vrot.lane.b32.xlu0 %v193, 17
  %v195 = vpop.permute.xlu0 %194
  %v197 = vrot.slane %v190, 2
  %198 = vrot.lane.b32.xlu0 %v197, 34
  %v199 = vpop.permute.xlu0 %198
  %vm201 = vcmask 138240
  %v202 = vsel %vm201, %v190, %v195
  %vm203 = vcmask 277504
  %v204 = vsel %vm203, %v202, %v199
  %v206 = vrot.slane %v191, 2
  %207 = vrot.lane.b32.xlu0 %v206, 34
  %v208 = vpop.permute.xlu0 %207
  %v210 = vsel %vm203, %v202, %v208
  %v211 = vrot.slane %v178, 7
  %v213 = vsel %vm189, 0.0, %v211
  %v214 = vsel %vm189, %v211, 0.0
  %v216 = vrot.slane %v213, 1
  %217 = vrot.lane.b32.xlu0 %v216, 17
  %v218 = vpop.permute.xlu0 %217
  %v220 = vrot.slane %v213, 2
  %221 = vrot.lane.b32.xlu0 %v220, 34
  %v222 = vpop.permute.xlu0 %221
  %v224 = vsel %vm201, %v213, %v218
  %v225 = vsel %vm203, %v224, %v222
  %v227 = vrot.slane %v214, 2
  %228 = vrot.lane.b32.xlu0 %v227, 34
  %v229 = vpop.permute.xlu0 %228
  %v231 = vsel %vm203, %v224, %v229
  %v233 = vrot.slane %v204, 1
  %v235 = vrot.slane %v204, 2
  %v238 = vrot.slane %v210, 3
  %v241 = vrot.slane %v225, 4
  %v243 = vrot.slane %v225, 5
  %v245 = vrot.slane %v225, 6
  %v248 = vrot.slane %v231, 7
  %v250 = vsel %vm189, %v204, %v233
  %vm251 = vcmask 1041408
  %v252 = vsel %vm251, %v250, %v235
  %vm253 = vcmask 1042432
  %v254 = vsel %vm253, %v252, %v238
  %vm255 = vcmask 1043456
  %v256 = vsel %vm255, %v254, %v241
  %vm257 = vcmask 1044480
  %v258 = vsel %vm257, %v256, %v243
  %v259 = vsel %vm175, %v258, %v245
  %v260 = vsel %vm170, %v259, %v248
  %v261 = vpack.c.bf16 %v260, %v260
  %v263 = vlaneseq
  %v264 = vshrl.u32 %v263, 7
  %v265 = vsub.s32 0, %v264
  %v266 = vrot.slane %v186, %v265
  %v275 = vunpack.c.l.b16 %v179
  %v276 = vunpack.c.l.b16 %v180
  %v277 = vunpack.c.l.b16 %v181
  %v278 = vunpack.c.l.b16 %v182
  %v279 = vunpack.c.l.b16 %v183
  %v280 = vunpack.c.l.b16 %v184
  %v281 = vunpack.c.l.b16 %v185
  %v282 = vpack.c.b16 %v276, %v275
  %v283 = vpack.c.b16 %v278, %v277
  %v284 = vpack.c.b16 %v280, %v279
  %v285 = vpack.c.b16 %v281, %v281
  %vm289 = vcmask 416768
  %v291 = vsel %vm289, %v261, 0
  %v293 = vsel %vm189, 4294967295, 65535
  %v294 = vsel %vm251, %v293, 0
  %v296 = vand.u32 %v285, %v294
  %298 = vmatprep.subr.bf16.mxu0 0
  %299 = vmatpush1.bf16.msra.mxu0 %v282
  %300 = vmatprep.subr.bf16.mxu0 0
  %301 = vmatpush1.bf16.msra.mxu0 %v283
  %302 = vmatprep.subr.bf16.mxu0 0
  %303 = vmatpush1.bf16.msra.mxu0 %v284
  %304 = vmatprep.subr.bf16.mxu0 0
  %305 = vmatpush1.bf16.msra.mxu0 %v296
  %306 = vmatprep.subr.bf16.mxu0 0
  %307 = vmatpush1.bf16.msra.mxu0 0
  %308 = vmatprep.subr.bf16.mxu0 0
  %309 = vmatpush1.bf16.msra.mxu0 0
  %310 = vmatprep.subr.bf16.mxu0 0
  %311 = vmatpush1.bf16.msra.mxu0 0
  %312 = vmatprep.subr.bf16.mxu0 0
  %313 = vmatpush1.bf16.msra.mxu0 0
  %314 = vmatprep.subr.bf16.mxu0 0
  %315 = vmatpush1.bf16.msra.mxu0 0
  %316 = vmatprep.subr.bf16.mxu0 0
  %317 = vmatpush1.bf16.msra.mxu0 0
  %318 = vmatprep.subr.bf16.mxu0 0
  %319 = vmatpush1.bf16.msra.mxu0 0
  %320 = vmatprep.subr.bf16.mxu0 0
  %321 = vmatpush1.bf16.msra.mxu0 0
  %322 = vmatprep.subr.bf16.mxu0 0
  %323 = vmatpush1.bf16.msra.mxu0 0
  %324 = vmatprep.subr.bf16.mxu0 0
  %325 = vmatpush1.bf16.msra.mxu0 0
  %326 = vmatprep.subr.bf16.mxu0 0
  %327 = vmatpush1.bf16.msra.mxu0 0
  %328 = vmatprep.subr.bf16.mxu0 0
  %329 = vmatpush1.bf16.msra.mxu0 0
  %330 = vmatprep.mubr.bf16.mxu0 0
  %331 = vmatmul.mubr.bf16.gmra.mrb[0].mxu0 %v291
  %v332 = vpop.f32.mrb[0].mxu0
  %v333 = vadd.f32 %v266, %v332
  %v334 = vpop.f32.mrb[0].mxu0
  %v335 = vpop.f32.mrb[0].mxu0
  %v336 = vpop.f32.mrb[0].mxu0
  %337 = vdwg.mxu0
  %v338 = vmax.f32 %v333, 0.0
  %v339 = vld [vmem:[%s4] sm:$0xf]
  %v340 = vld [vmem:[%s4 + $0x4] sm:$0xf]
  %v341 = vld [vmem:[%s4 + $0x8] sm:$0xf]
  %v342 = vld [vmem:[%s4 + $0xc] sm:$0xf]
  %v343 = vld [vmem:[%s4 + $0x10] sm:$0xf]
  %v344 = vld [vmem:[%s4 + $0x14] sm:$0xf]
  %v345 = vld [vmem:[%s5] sm:$0x1]
  %v347 = vrot.slane %v338, 7
  %v349 = vsel %vm189, 0.0, %v347
  %v350 = vsel %vm257, %v349, 0.0
  %v352 = vrot.slane %v350, 1
  %353 = vrot.lane.b32.xlu0 %v352, 16
  %v354 = vpop.permute.xlu0 %353
  %v356 = vrot.slane %v350, 2
  %357 = vrot.lane.b32.xlu0 %v356, 32
  %v358 = vpop.permute.xlu0 %357
  %vm360 = vcmask 130048
  %v361 = vsel %vm360, %v350, %v354
  %v362 = vsel %vm74, %v361, %v358
  %v363 = vrot.slane %v338, 3
  %v365 = vsel %vm189, 0.0, %v363
  %v366 = vsel %vm257, %v365, 0.0
  %v368 = vrot.slane %v366, 1
  %369 = vrot.lane.b32.xlu0 %v368, 16
  %v370 = vpop.permute.xlu0 %369
  %v372 = vrot.slane %v366, 2
  %373 = vrot.lane.b32.xlu0 %v372, 32
  %v374 = vpop.permute.xlu0 %373
  %v376 = vsel %vm360, %v366, %v370
  %v377 = vsel %vm74, %v376, %v374
  %v379 = vrot.slane %v362, 1
  %v382 = vrot.slane %v377, 6
  %v384 = vrot.slane %v377, 7
  %v386 = vsel %vm189, %v362, %v379
  %v387 = vsel %vm251, %v386, %v382
  %v388 = vsel %vm253, %v387, %v384
  %v389 = vpack.c.bf16 %v388, %v388
  %v391 = vlaneseq
  %v392 = vshrl.u32 %v391, 7
  %v393 = vsub.s32 0, %v392
  %v394 = vrot.slane %v345, %v393
  %v402 = vunpack.c.l.b16 %v339
  %v403 = vunpack.c.l.b16 %v340
  %v404 = vunpack.c.l.b16 %v341
  %v405 = vunpack.c.l.b16 %v342
  %v406 = vunpack.c.l.b16 %v343
  %v407 = vunpack.c.l.b16 %v344
  %v408 = vpack.c.b16 %v403, %v402
  %v409 = vpack.c.b16 %v405, %v404
  %v410 = vpack.c.b16 %v407, %v406
  %vm414 = vcmask 392192
  %v416 = vsel %vm414, %v389, 0
  %418 = vmatprep.subr.bf16.mxu0 0
  %419 = vmatpush1.bf16.msra.mxu0 %v408
  %420 = vmatprep.subr.bf16.mxu0 0
  %421 = vmatpush1.bf16.msra.mxu0 %v409
  %422 = vmatprep.subr.bf16.mxu0 0
  %423 = vmatpush1.bf16.msra.mxu0 %v410
  %424 = vmatprep.subr.bf16.mxu0 0
  %425 = vmatpush1.bf16.msra.mxu0 0
  %426 = vmatprep.subr.bf16.mxu0 0
  %427 = vmatpush1.bf16.msra.mxu0 0
  %428 = vmatprep.subr.bf16.mxu0 0
  %429 = vmatpush1.bf16.msra.mxu0 0
  %430 = vmatprep.subr.bf16.mxu0 0
  %431 = vmatpush1.bf16.msra.mxu0 0
  %432 = vmatprep.subr.bf16.mxu0 0
  %433 = vmatpush1.bf16.msra.mxu0 0
  %434 = vmatprep.subr.bf16.mxu0 0
  %435 = vmatpush1.bf16.msra.mxu0 0
  %436 = vmatprep.subr.bf16.mxu0 0
  %437 = vmatpush1.bf16.msra.mxu0 0
  %438 = vmatprep.subr.bf16.mxu0 0
  %439 = vmatpush1.bf16.msra.mxu0 0
  %440 = vmatprep.subr.bf16.mxu0 0
  %441 = vmatpush1.bf16.msra.mxu0 0
  %442 = vmatprep.subr.bf16.mxu0 0
  %443 = vmatpush1.bf16.msra.mxu0 0
  %444 = vmatprep.subr.bf16.mxu0 0
  %445 = vmatpush1.bf16.msra.mxu0 0
  %446 = vmatprep.subr.bf16.mxu0 0
  %447 = vmatpush1.bf16.msra.mxu0 0
  %448 = vmatprep.subr.bf16.mxu0 0
  %449 = vmatpush1.bf16.msra.mxu0 0
  %450 = vmatprep.mubr.bf16.mxu0 0
  %451 = vmatmul.mubr.bf16.gmra.mrb[0].mxu0 %v416
  %v452 = vpop.f32.mrb[0].mxu0
  %v453 = vadd.f32 %v394, %v452
  %v454 = vpop.f32.mrb[0].mxu0
  %v455 = vpop.f32.mrb[0].mxu0
  %v456 = vpop.f32.mrb[0].mxu0
  %457 = vdwg.mxu0
  %v458 = vmax.f32 %v453, 0.0
  %v459 = vld [vmem:[%s6] sm:$0xf]
  %v460 = vld [vmem:[%s6 + $0x4] sm:$0xf]
  %v461 = vld [vmem:[%s6 + $0x8] sm:$0xf]
  %v462 = vld [vmem:[%s6 + $0xc] sm:$0xf]
  %v463 = vld [vmem:[%s6 + $0x10] sm:$0xf]
  %v464 = vld [vmem:[%s6 + $0x14] sm:$0xf]
  %v465 = vld [vmem:[%s7] sm:$0x1]
  %v467 = vrot.slane %v458, 7
  %v469 = vsel %vm189, 0.0, %v467
  %v470 = vsel %vm253, %v469, 0.0
  %v472 = vrot.slane %v470, 1
  %473 = vrot.lane.b32.xlu0 %v472, 16
  %v474 = vpop.permute.xlu0 %473
  %v476 = vrot.slane %v470, 2
  %477 = vrot.lane.b32.xlu0 %v476, 32
  %v478 = vpop.permute.xlu0 %477
  %v480 = vsel %vm360, %v470, %v474
  %v481 = vsel %vm74, %v480, %v478
  %v482 = vrot.slane %v458, 1
  %v484 = vsel %vm189, 0.0, %v482
  %v485 = vsel %vm253, %v484, 0.0
  %v487 = vrot.slane %v485, 1
  %488 = vrot.lane.b32.xlu0 %v487, 16
  %v489 = vpop.permute.xlu0 %488
  %v491 = vrot.slane %v485, 2
  %492 = vrot.lane.b32.xlu0 %v491, 32
  %v493 = vpop.permute.xlu0 %492
  %v495 = vsel %vm360, %v485, %v489
  %v496 = vsel %vm74, %v495, %v493
  %v498 = vrot.slane %v496, 7
  %v500 = vsel %vm189, %v481, %v498
  %v501 = vpack.c.bf16 %v500, %v500
  %v503 = vlaneseq
  %v504 = vshrl.u32 %v503, 7
  %v505 = vsub.s32 0, %v504
  %v506 = vrot.slane %v465, %v505
  %v514 = vunpack.c.l.b16 %v459
  %v515 = vunpack.c.l.b16 %v460
  %v516 = vunpack.c.l.b16 %v461
  %v517 = vunpack.c.l.b16 %v462
  %v518 = vunpack.c.l.b16 %v463
  %v519 = vunpack.c.l.b16 %v464
  %v520 = vpack.c.b16 %v515, %v514
  %v521 = vpack.c.b16 %v517, %v516
  %v522 = vpack.c.b16 %v519, %v518
  %v527 = vsel %vm414, %v501, 0
  %529 = vmatprep.subr.bf16.mxu0 0
  %530 = vmatpush1.bf16.msra.mxu0 %v520
  %531 = vmatprep.subr.bf16.mxu0 0
  %532 = vmatpush1.bf16.msra.mxu0 %v521
  %533 = vmatprep.subr.bf16.mxu0 0
  %534 = vmatpush1.bf16.msra.mxu0 %v522
  %535 = vmatprep.subr.bf16.mxu0 0
  %536 = vmatpush1.bf16.msra.mxu0 0
  %537 = vmatprep.subr.bf16.mxu0 0
  %538 = vmatpush1.bf16.msra.mxu0 0
  %539 = vmatprep.subr.bf16.mxu0 0
  %540 = vmatpush1.bf16.msra.mxu0 0
  %541 = vmatprep.subr.bf16.mxu0 0
  %542 = vmatpush1.bf16.msra.mxu0 0
  %543 = vmatprep.subr.bf16.mxu0 0
  %544 = vmatpush1.bf16.msra.mxu0 0
  %545 = vmatprep.subr.bf16.mxu0 0
  %546 = vmatpush1.bf16.msra.mxu0 0
  %547 = vmatprep.subr.bf16.mxu0 0
  %548 = vmatpush1.bf16.msra.mxu0 0
  %549 = vmatprep.subr.bf16.mxu0 0
  %550 = vmatpush1.bf16.msra.mxu0 0
  %551 = vmatprep.subr.bf16.mxu0 0
  %552 = vmatpush1.bf16.msra.mxu0 0
  %553 = vmatprep.subr.bf16.mxu0 0
  %554 = vmatpush1.bf16.msra.mxu0 0
  %555 = vmatprep.subr.bf16.mxu0 0
  %556 = vmatpush1.bf16.msra.mxu0 0
  %557 = vmatprep.subr.bf16.mxu0 0
  %558 = vmatpush1.bf16.msra.mxu0 0
  %559 = vmatprep.subr.bf16.mxu0 0
  %560 = vmatpush1.bf16.msra.mxu0 0
  %561 = vmatprep.mubr.bf16.mxu0 0
  %562 = vmatmul.mubr.bf16.gmra.mrb[0].mxu0 %v527
  %v563 = vpop.f32.mrb[0].mxu0
  %v564 = vadd.f32 %v506, %v563
  %v565 = vpop.f32.mrb[0].mxu0
  %v566 = vpop.f32.mrb[0].mxu0
  %v567 = vpop.f32.mrb[0].mxu0
  %568 = vdwg.mxu0
  %v569 = vmax.f32 %v564, 0.0
  %v570 = vld [vmem:[%s8] sm:$0xf]
  %v571 = vld [vmem:[%s8 + $0x4] sm:$0xf]
  %v572 = vld [vmem:[%s8 + $0x8] sm:$0xf]
  %v573 = vld [vmem:[%s8 + $0xc] sm:$0xf]
  %v574 = vld [vmem:[%s8 + $0x10] sm:$0xf]
  %v575 = vld [vmem:[%s8 + $0x14] sm:$0xf]
  %v576 = vld [vmem:[%s9] sm:$0x1]
  %v578 = vrot.slane %v569, 7
  %v580 = vsel %vm189, 0.0, %v578
  %v581 = vsel %vm251, %v580, 0.0
  %v583 = vrot.slane %v581, 1
  %584 = vrot.lane.b32.xlu0 %v583, 16
  %v585 = vpop.permute.xlu0 %584
  %v587 = vrot.slane %v581, 2
  %588 = vrot.lane.b32.xlu0 %v587, 32
  %v589 = vpop.permute.xlu0 %588
  %v591 = vsel %vm360, %v581, %v585
  %v592 = vsel %vm74, %v591, %v589
  %v593 = vsel %vm189, 0.0, %v569
  %v594 = vsel %vm251, %v593, 0.0
  %v596 = vrot.slane %v594, 1
  %597 = vrot.lane.b32.xlu0 %v596, 16
  %v598 = vpop.permute.xlu0 %597
  %v600 = vrot.slane %v594, 2
  %601 = vrot.lane.b32.xlu0 %v600, 32
  %v602 = vpop.permute.xlu0 %601
  %v604 = vsel %vm360, %v594, %v598
  %v605 = vsel %vm74, %v604, %v602
  %v607 = vrot.slane %v605, 7
  %v609 = vsel %vm189, %v592, %v607
  %v610 = vpack.c.bf16 %v609, %v609
  %v612 = vlaneseq
  %v613 = vshrl.u32 %v612, 7
  %v614 = vsub.s32 0, %v613
  %v615 = vrot.slane %v576, %v614
  %v623 = vunpack.c.l.b16 %v570
  %v624 = vunpack.c.l.b16 %v571
  %v625 = vunpack.c.l.b16 %v572
  %v626 = vunpack.c.l.b16 %v573
  %v627 = vunpack.c.l.b16 %v574
  %v628 = vunpack.c.l.b16 %v575
  %v629 = vpack.c.b16 %v624, %v623
  %v630 = vpack.c.b16 %v626, %v625
  %v631 = vpack.c.b16 %v628, %v627
  %v636 = vsel %vm414, %v610, 0
  %638 = vmatprep.subr.bf16.mxu0 0
  %639 = vmatpush1.bf16.msra.mxu0 %v629
  %640 = vmatprep.subr.bf16.mxu0 0
  %641 = vmatpush1.bf16.msra.mxu0 %v630
  %642 = vmatprep.subr.bf16.mxu0 0
  %643 = vmatpush1.bf16.msra.mxu0 %v631
  %644 = vmatprep.subr.bf16.mxu0 0
  %645 = vmatpush1.bf16.msra.mxu0 0
  %646 = vmatprep.subr.bf16.mxu0 0
  %647 = vmatpush1.bf16.msra.mxu0 0
  %648 = vmatprep.subr.bf16.mxu0 0
  %649 = vmatpush1.bf16.msra.mxu0 0
  %650 = vmatprep.subr.bf16.mxu0 0
  %651 = vmatpush1.bf16.msra.mxu0 0
  %652 = vmatprep.subr.bf16.mxu0 0
  %653 = vmatpush1.bf16.msra.mxu0 0
  %654 = vmatprep.subr.bf16.mxu0 0
  %655 = vmatpush1.bf16.msra.mxu0 0
  %656 = vmatprep.subr.bf16.mxu0 0
  %657 = vmatpush1.bf16.msra.mxu0 0
  %658 = vmatprep.subr.bf16.mxu0 0
  %659 = vmatpush1.bf16.msra.mxu0 0
  %660 = vmatprep.subr.bf16.mxu0 0
  %661 = vmatpush1.bf16.msra.mxu0 0
  %662 = vmatprep.subr.bf16.mxu0 0
  %663 = vmatpush1.bf16.msra.mxu0 0
  %664 = vmatprep.subr.bf16.mxu0 0
  %665 = vmatpush1.bf16.msra.mxu0 0
  %666 = vmatprep.subr.bf16.mxu0 0
  %667 = vmatpush1.bf16.msra.mxu0 0
  %668 = vmatprep.subr.bf16.mxu0 0
  %669 = vmatpush1.bf16.msra.mxu0 0
  %670 = vmatprep.mubr.bf16.mxu0 0
  %671 = vmatmul.mubr.bf16.gmra.mrb[0].mxu0 %v636
  %v672 = vpop.f32.mrb[0].mxu0
  %v673 = vadd.f32 %v615, %v672
  %v674 = vpop.f32.mrb[0].mxu0
  %v675 = vpop.f32.mrb[0].mxu0
  %v676 = vpop.f32.mrb[0].mxu0
  %677 = vdwg.mxu0
  %v678 = vmax.f32 %v673, 0.0
  %v679 = vld [vmem:[%s10] sm:$0xff]
  %v680 = vld [vmem:[%s10 + $0x8] sm:$0xff]
  %v681 = vld [vmem:[%s10 + $0x10] sm:$0xff]
  %v682 = vld [vmem:[%s10 + $0x18] sm:$0xff]
  %v683 = vld [vmem:[%s11] sm:$0x1]
  %v685 = vlaneseq
  %v686 = vshrl.u32 %v685, 7
  %v687 = vsub.s32 0, %v686
  %v688 = vrot.slane %v683, %v687
  %v691 = vsel %vm74, %v678, 0
  %693 = vmatprep.subr.mxu0 0.0
  %694 = vmatpush1.msra.mxu0 %v679
  %695 = vmatprep.subr.mxu0 0.0
  %696 = vmatpush1.msra.mxu0 %v680
  %697 = vmatprep.subr.mxu0 0.0
  %698 = vmatpush1.msra.mxu0 %v681
  %699 = vmatprep.subr.mxu0 0.0
  %700 = vmatpush1.msra.mxu0 %v682
  %701 = vmatprep.subr.mxu0 0.0
  %702 = vmatpush1.msra.mxu0 0.0
  %703 = vmatprep.subr.mxu0 0.0
  %704 = vmatpush1.msra.mxu0 0.0
  %705 = vmatprep.subr.mxu0 0.0
  %706 = vmatpush1.msra.mxu0 0.0
  %707 = vmatprep.subr.mxu0 0.0
  %708 = vmatpush1.msra.mxu0 0.0
  %709 = vmatprep.subr.mxu0 0.0
  %710 = vmatpush1.msra.mxu0 0.0
  %711 = vmatprep.subr.mxu0 0.0
  %712 = vmatpush1.msra.mxu0 0.0
  %713 = vmatprep.subr.mxu0 0.0
  %714 = vmatpush1.msra.mxu0 0.0
  %715 = vmatprep.subr.mxu0 0.0
  %716 = vmatpush1.msra.mxu0 0.0
  %717 = vmatprep.subr.mxu0 0.0
  %718 = vmatpush1.msra.mxu0 0.0
  %719 = vmatprep.subr.mxu0 0.0
  %720 = vmatpush1.msra.mxu0 0.0
  %721 = vmatprep.subr.mxu0 0.0
  %722 = vmatpush1.msra.mxu0 0.0
  %723 = vmatprep.subr.mxu0 0.0
  %724 = vmatpush1.msra.mxu0 0.0
  %725 = vmatprep.subr.mxu0 0.0
  %726 = vmatpush1.msra.mxu0 0.0
  %727 = vmatprep.subr.mxu0 0.0
  %728 = vmatpush1.msra.mxu0 0.0
  %729 = vmatprep.subr.mxu0 0.0
  %730 = vmatpush1.msra.mxu0 0.0
  %731 = vmatprep.subr.mxu0 0.0
  %732 = vmatpush1.msra.mxu0 0.0
  %733 = vmatprep.subr.mxu0 0.0
  %734 = vmatpush1.msra.mxu0 0.0
  %735 = vmatprep.subr.mxu0 0.0
  %736 = vmatpush1.msra.mxu0 0.0
  %737 = vmatprep.subr.mxu0 0.0
  %738 = vmatpush1.msra.mxu0 0.0
  %739 = vmatprep.subr.mxu0 0.0
  %740 = vmatpush1.msra.mxu0 0.0
  %741 = vmatprep.subr.mxu0 0.0
  %742 = vmatpush1.msra.mxu0 0.0
  %743 = vmatprep.subr.mxu0 0.0
  %744 = vmatpush1.msra.mxu0 0.0
  %745 = vmatprep.subr.mxu0 0.0
  %746 = vmatpush1.msra.mxu0 0.0
  %747 = vmatprep.subr.mxu0 0.0
  %748 = vmatpush1.msra.mxu0 0.0
  %749 = vmatprep.subr.mxu0 0.0
  %750 = vmatpush1.msra.mxu0 0.0
  %751 = vmatprep.subr.mxu0 0.0
  %752 = vmatpush1.msra.mxu0 0.0
  %753 = vmatprep.subr.mxu0 0.0
  %754 = vmatpush1.msra.mxu0 0.0
  %755 = vmatprep.subr.mxu0 0.0
  %756 = vmatpush1.msra.mxu0 0.0
  %757 = vmatprep.mubr.f32.mxu0 0.0
  %758 = vmatmul.mubr.f32.gmra.mrb[0].mxu0 %v691
  %v759 = vpop.f32.mrb[0].mxu0
  %v760 = vadd.f32 %v688, %v759
  %v761 = vpop.f32.mrb[0].mxu0
  %762 = vdwg.mxu0
  %v763 = vxor.u32 %v760, 2147483648
  %v764 = vmul.f32 %v763, 1.442695
  %v765 = vpow.pop %v764
  %v766 = vadd.f32 %v765, 1.0
  %v767 = vrcp.pop %v766
  %v768 = vmul.f32 1.0, %v767
  %v769 = vtanh.pop %v760
  %771 = vrot.lane.b32.xlu0 %v769, 64
  %v772 = vpop.permute.xlu0 %771
  %v774 = vmul.f32 %v768, %v772
  %v775 = vtanh.pop %v774
  %777 = vrot.lane.b32.xlu0 %v775, 96
  %v778 = vpop.permute.xlu0 %777
  %v780 = vmul.f32 %v768, %v778
  %782 = vrot.lane.b32.xlu0 %v780, 32
  %v783 = vpop.permute.xlu0 %782
  %vm785 = vcmask 254976
  %786 = vst.msk [vmem:[%s15] sm:$0x3] %vm785, %v783
  %787 = vst.msk [vmem:[%s16] sm:$0x3] %vm785, %v774
  %v788 = vmax.f32 %v780, 0.0
  %v789 = vld [vmem:[%s12] sm:$0xff]
  %v790 = vld [vmem:[%s12 + $0x8] sm:$0xff]
  %v791 = vld [vmem:[%s12 + $0x10] sm:$0xff]
  %v792 = vld [vmem:[%s12 + $0x18] sm:$0xff]
  %v793 = vld [vmem:[#allocation2] sm:$0x1]
  %v795 = vlaneseq
  %v796 = vshrl.u32 %v795, 7
  %v797 = vsub.s32 0, %v796
  %v798 = vrot.slane %v793, %v797
  %801 = vrot.lane.b32.xlu0 %v788, 32
  %v802 = vpop.permute.xlu0 %801
  %v803 = vsel %vm74, %v802, 0
  %805 = vmatprep.subr.mxu0 0.0
  %806 = vmatpush1.msra.mxu0 %v789
  %807 = vmatprep.subr.mxu0 0.0
  %808 = vmatpush1.msra.mxu0 %v790
  %809 = vmatprep.subr.mxu0 0.0
  %810 = vmatpush1.msra.mxu0 %v791
  %811 = vmatprep.subr.mxu0 0.0
  %812 = vmatpush1.msra.mxu0 %v792
  %813 = vmatprep.subr.mxu0 0.0
  %814 = vmatpush1.msra.mxu0 0.0
  %815 = vmatprep.subr.mxu0 0.0
  %816 = vmatpush1.msra.mxu0 0.0
  %817 = vmatprep.subr.mxu0 0.0
  %818 = vmatpush1.msra.mxu0 0.0
  %819 = vmatprep.subr.mxu0 0.0
  %820 = vmatpush1.msra.mxu0 0.0
  %821 = vmatprep.subr.mxu0 0.0
  %822 = vmatpush1.msra.mxu0 0.0
  %823 = vmatprep.subr.mxu0 0.0
  %824 = vmatpush1.msra.mxu0 0.0
  %825 = vmatprep.subr.mxu0 0.0
  %826 = vmatpush1.msra.mxu0 0.0
  %827 = vmatprep.subr.mxu0 0.0
  %828 = vmatpush1.msra.mxu0 0.0
  %829 = vmatprep.subr.mxu0 0.0
  %830 = vmatpush1.msra.mxu0 0.0
  %831 = vmatprep.subr.mxu0 0.0
  %832 = vmatpush1.msra.mxu0 0.0
  %833 = vmatprep.subr.mxu0 0.0
  %834 = vmatpush1.msra.mxu0 0.0
  %835 = vmatprep.subr.mxu0 0.0
  %836 = vmatpush1.msra.mxu0 0.0
  %837 = vmatprep.subr.mxu0 0.0
  %838 = vmatpush1.msra.mxu0 0.0
  %839 = vmatprep.subr.mxu0 0.0
  %840 = vmatpush1.msra.mxu0 0.0
  %841 = vmatprep.subr.mxu0 0.0
  %842 = vmatpush1.msra.mxu0 0.0
  %843 = vmatprep.subr.mxu0 0.0
  %844 = vmatpush1.msra.mxu0 0.0
  %845 = vmatprep.subr.mxu0 0.0
  %846 = vmatpush1.msra.mxu0 0.0
  %847 = vmatprep.subr.mxu0 0.0
  %848 = vmatpush1.msra.mxu0 0.0
  %849 = vmatprep.subr.mxu0 0.0
  %850 = vmatpush1.msra.mxu0 0.0
  %851 = vmatprep.subr.mxu0 0.0
  %852 = vmatpush1.msra.mxu0 0.0
  %853 = vmatprep.subr.mxu0 0.0
  %854 = vmatpush1.msra.mxu0 0.0
  %855 = vmatprep.subr.mxu0 0.0
  %856 = vmatpush1.msra.mxu0 0.0
  %857 = vmatprep.subr.mxu0 0.0
  %858 = vmatpush1.msra.mxu0 0.0
  %859 = vmatprep.subr.mxu0 0.0
  %860 = vmatpush1.msra.mxu0 0.0
  %861 = vmatprep.subr.mxu0 0.0
  %862 = vmatpush1.msra.mxu0 0.0
  %863 = vmatprep.subr.mxu0 0.0
  %864 = vmatpush1.msra.mxu0 0.0
  %865 = vmatprep.subr.mxu0 0.0
  %866 = vmatpush1.msra.mxu0 0.0
  %867 = vmatprep.subr.mxu0 0.0
  %868 = vmatpush1.msra.mxu0 0.0
  %869 = vmatprep.mubr.f32.mxu0 0.0
  %870 = vmatmul.mubr.f32.gmra.mrb[0].mxu0 %v803
  %v871 = vpop.f32.mrb[0].mxu0
  %v872 = vadd.f32 %v798, %v871
  %v873 = vpop.f32.mrb[0].mxu0
  %874 = vdwg.mxu0
  %v875 = vxor.u32 %v872, 2147483648
  %v876 = vmul.f32 %v875, 1.442695
  %v877 = vpow.pop %v876
  %v878 = vadd.f32 %v877, 1.0
  %v879 = vrcp.pop %v878
  %v880 = vmul.f32 1.0, %v879
  %vm881 = vcmask 1024
  %882 = vst.msk [vmem:[%s14] sm:$0x3] %vm881, %v880
  // Predicated region
  $region58: #{silero_vad_forward.1} parent=0 // pred_check
    _
  $region59: #{silero_vad_forward.1} parent=0 // pred_check_branch
    %884 = sbr.rel (0) target = $region61
  $region60: #{silero_vad_forward.1} parent=0 // pred_region
    _
  $region61: #{silero_vad_forward.1} parent=0 // pred_fallthru
    _
  // Predicated region
  $region62: #{silero_vad_forward.1} parent=0 // pred_check
    _
  $region63: #{silero_vad_forward.1} parent=0 // pred_check_branch
    %886 = sbr.rel (0) target = $region65
  $region64: #{silero_vad_forward.1} parent=0 // pred_region
    _
  $region65: #{silero_vad_forward.1} parent=0 // pred_fallthru
    _
  // Predicated region
  $region66: #{silero_vad_forward.1} parent=0 // pred_check
    _
  $region67: #{silero_vad_forward.1} parent=0 // pred_check_branch
    %888 = sbr.rel (0) target = $region69
  $region68: #{silero_vad_forward.1} parent=0 // pred_region
    _
  $region69: #{silero_vad_forward.1} parent=0 // pred_fallthru
    _
  // Predicated region
  $region70: #{silero_vad_forward.1} parent=0 // pred_check
    _
  $region71: #{silero_vad_forward.1} parent=0 // pred_check_branch
    %890 = sbr.rel (0) target = $region73
  $region72: #{silero_vad_forward.1} parent=0 // pred_region
    _
  $region73: #{silero_vad_forward.1} parent=0 // pred_fallthru
    _
  // Predicated region
  $region74: #{silero_vad_forward.1} parent=0 // pred_check
    _
  $region75: #{silero_vad_forward.1} parent=0 // pred_check_branch
    %892 = sbr.rel (0) target = $region77
  $region76: #{silero_vad_forward.1} parent=0 // pred_region
    _
  $region77: #{silero_vad_forward.1} parent=0 // pred_fallthru
    _
  // Predicated region
  $region78: #{silero_vad_forward.1} parent=0 // pred_check
    _
  $region79: #{silero_vad_forward.1} parent=0 // pred_check_branch
    %894 = sbr.rel (0) target = $region81
  $region80: #{silero_vad_forward.1} parent=0 // pred_region
    _
  $region81: #{silero_vad_forward.1} parent=0 // pred_fallthru
    _

</llo_original>
